<compile_context>
chip_gen: v6e
topology: v6e:2x2x1
jax: 0.10.0
libtpu: 0.0.40
codegen_flags: <defaults>
</compile_context>

<pallas_src>
import jax
import jax.numpy as jnp
from jax.experimental import pallas as pl
from jax.experimental.pallas import tpu as pltpu

HIDDEN = 128
SMALL_BATCH_MAX = 1024   # no-grid, everything resident in VMEM
MAX_TILE_M = 2048        # cap on rows per grid step for the tiled path


def dqn_kernel(x_ref, w1_ref, b1_ref, w2_ref, b2_ref, o_ref):
    # fc1: [TM, in] @ [in, 128] + [1, 128] -> ReLU (f32 accumulate on MXU)
    h = jnp.dot(x_ref[...], w1_ref[...], preferred_element_type=jnp.float32)
    h = jnp.maximum(h + b1_ref[...], 0.0)
    # fc2: [TM, 128] @ [128, out] + [1, out]; narrow output stored directly.
    out = jnp.dot(h, w2_ref[...], preferred_element_type=jnp.float32)
    o_ref[...] = (out + b2_ref[...]).astype(o_ref.dtype)


def _round_up(x, m):
    return ((x + m - 1) // m) * m


def dqn_forward(x, w1_t, b1, w2_t, b2):
    """x: [B, in]; w1_t: [in, 128]; b1: [1, 128]; w2_t: [128, out]; b2: [1, out]."""
    B, in_size = x.shape
    out_size = w2_t.shape[1]
    out_shape = jax.ShapeDtypeStruct((B, out_size), jnp.float32)

    if B <= SMALL_BATCH_MAX:
        # Latency-bound small path: no grid, no pipeline bookkeeping; all
        # operands resident in VMEM (a few hundred KiB at most).
        return pl.pallas_call(
            dqn_kernel,
            out_shape=out_shape,
            in_specs=[pl.BlockSpec(memory_space=pltpu.MemorySpace.VMEM)] * 5,
            out_specs=pl.BlockSpec(memory_space=pltpu.MemorySpace.VMEM),
        )(x, w1_t, b1, w2_t, b2)

    # Batched path: even number of tiles (v7x: two TCs split the grid), each
    # capped at MAX_TILE_M rows and rounded up to the 8-row sublane multiple.
    num_tiles = max(2, 2 * pl.cdiv(pl.cdiv(B, MAX_TILE_M), 2))
    tile_m = _round_up(pl.cdiv(B, num_tiles), 8)
    grid = (pl.cdiv(B, tile_m),)

    return pl.pallas_call(
        dqn_kernel,
        out_shape=out_shape,
        grid=grid,
        in_specs=[
            pl.BlockSpec((tile_m, in_size), lambda i: (i, 0)),
            pl.BlockSpec((in_size, HIDDEN), lambda i: (0, 0)),   # resident
            pl.BlockSpec((1, HIDDEN), lambda i: (0, 0)),         # resident
            pl.BlockSpec((HIDDEN, out_size), lambda i: (0, 0)),  # resident
            pl.BlockSpec((1, out_size), lambda i: (0, 0)),       # resident
        ],
        out_specs=pl.BlockSpec((tile_m, out_size), lambda i: (i, 0)),
        compiler_params=pltpu.CompilerParams(
            dimension_semantics=("parallel",)  # v7x: split grid across 2 TCs
        ),
    )(x, w1_t, b1, w2_t, b2)


def init_dqn_params(key, input_size, output_size):
    """Deterministic init matching nn.Linear default: U(-1/sqrt(fan_in), +1/sqrt(fan_in))."""
    k1, k2, k3, k4 = jax.random.split(key, 4)
    bound1 = 1.0 / jnp.sqrt(jnp.float32(input_size))
    bound2 = 1.0 / jnp.sqrt(jnp.float32(HIDDEN))
    # Stored pre-transposed: [in, out]
    w1_t = jax.random.uniform(k1, (input_size, HIDDEN), jnp.float32, -bound1, bound1)
    b1 = jax.random.uniform(k2, (1, HIDDEN), jnp.float32, -bound1, bound1)
    w2_t = jax.random.uniform(k3, (HIDDEN, output_size), jnp.float32, -bound2, bound2)
    b2 = jax.random.uniform(k4, (1, output_size), jnp.float32, -bound2, bound2)
    return w1_t, b1, w2_t, b2


if __name__ == "__main__":
    key = jax.random.PRNGKey(0)
    input_size = 8    # small state vector (FlappyBird observation)
    output_size = 2   # actions: flap / no-flap

    kx, kp, kx2 = jax.random.split(key, 3)
    w1_t, b1, w2_t, b2 = init_dqn_params(kp, input_size, output_size)

    # 1) Small latency-bound path (single-step inference, B=8): no grid.
    x_small = jax.random.normal(kx, (8, input_size), jnp.float32)
    out_small = jax.block_until_ready(dqn_forward(x_small, w1_t, b1, w2_t, b2))
    ref_small = jnp.maximum(x_small @ w1_t + b1, 0.0) @ w2_t + b2
    assert out_small.shape == (8, output_size)
    assert jnp.allclose(out_small, ref_small, atol=1e-5, rtol=1e-5)

    # 2) Batched replay-buffer path: batch-tiled grid, parallel semantics.
    B = 4096
    x_big = jax.random.normal(kx2, (B, input_size), jnp.float32)
    out_big = jax.block_until_ready(dqn_forward(x_big, w1_t, b1, w2_t, b2))
    ref_big = jnp.maximum(x_big @ w1_t + b1, 0.0) @ w2_t + b2
    assert out_big.shape == (B, output_size)
    assert jnp.allclose(out_big, ref_big, atol=1e-4, rtol=1e-4)

    print("KERNEL_OK")
</pallas_src>

<mosaic_0001>
module attributes {stable_mosaic.version = 11 : i64} {
  func.func @dqn_kernel(%arg0: memref<8x8xf32, #tpu.memory_space<vmem>>, %arg1: memref<8x128xf32, #tpu.memory_space<vmem>>, %arg2: memref<1x128xf32, #tpu.memory_space<vmem>>, %arg3: memref<128x2xf32, #tpu.memory_space<vmem>>, %arg4: memref<1x2xf32, #tpu.memory_space<vmem>>, %arg5: memref<8x2xf32, #tpu.memory_space<vmem>>) attributes {dimension_semantics = [], scalar_prefetch = 0 : i64, scratch_operands = 0 : i64, tpu.core_type = #tpu.core_type<tc>} {
    %c0 = arith.constant 0 : index
    %c0_0 = arith.constant 0 : index
    %0 = vector.load %arg0[%c0, %c0_0] : memref<8x8xf32, #tpu.memory_space<vmem>>, vector<8x8xf32>
    %c0_1 = arith.constant 0 : index
    %c0_2 = arith.constant 0 : index
    %1 = vector.load %arg1[%c0_1, %c0_2] : memref<8x128xf32, #tpu.memory_space<vmem>>, vector<8x128xf32>
    %cst = arith.constant dense<0.000000e+00> : vector<8x128xf32>
    %2 = tpu.matmul %0, %1, %cst {dimension_numbers = #tpu.dot_dimension_numbers<[1], [0], [0], [1], [0, 0, 1, 1], [], []>} : vector<8x8xf32>, vector<8x128xf32>, vector<8x128xf32> -> vector<8x128xf32>
    %c0_3 = arith.constant 0 : index
    %c0_4 = arith.constant 0 : index
    %3 = vector.load %arg2[%c0_3, %c0_4] : memref<1x128xf32, #tpu.memory_space<vmem>>, vector<1x128xf32>
    %4 = vector.broadcast %3 : vector<1x128xf32> to vector<8x128xf32>
    %5 = arith.addf %2, %4 : vector<8x128xf32>
    %cst_5 = arith.constant 0.000000e+00 : f32
    %6 = vector.broadcast %cst_5 : f32 to vector<8x128xf32>
    %7 = arith.maximumf %5, %6 : vector<8x128xf32>
    %c0_6 = arith.constant 0 : index
    %c0_7 = arith.constant 0 : index
    %8 = vector.load %arg3[%c0_6, %c0_7] : memref<128x2xf32, #tpu.memory_space<vmem>>, vector<128x2xf32>
    %cst_8 = arith.constant dense<0.000000e+00> : vector<8x2xf32>
    %9 = tpu.matmul %7, %8, %cst_8 {dimension_numbers = #tpu.dot_dimension_numbers<[1], [0], [0], [1], [0, 0, 1, 1], [], []>} : vector<8x128xf32>, vector<128x2xf32>, vector<8x2xf32> -> vector<8x2xf32>
    %c0_9 = arith.constant 0 : index
    %c0_10 = arith.constant 0 : index
    %10 = vector.load %arg4[%c0_9, %c0_10] : memref<1x2xf32, #tpu.memory_space<vmem>>, vector<1x2xf32>
    %11 = vector.broadcast %10 : vector<1x2xf32> to vector<8x2xf32>
    %12 = arith.addf %9, %11 : vector<8x2xf32>
    %c0_11 = arith.constant 0 : index
    %c0_12 = arith.constant 0 : index
    %13 = vector.load %arg5[%c0_11, %c0_12] : memref<8x2xf32, #tpu.memory_space<vmem>>, vector<8x2xf32>
    tpu.vector_store %arg5[%c0_11, %c0_12], %12 {strides = array<i32>} : memref<8x2xf32, #tpu.memory_space<vmem>>, vector<8x2xf32>,
    return
  }
}

</mosaic_0001>

<llo_original>
// kernel: tpu_custom_call.1
$region0: #{tpu_custom_call.1}
  #allocation0 [shape = 'u32[]', space=smem, size = 0x4, offset = 0x4, fixed_abs, tag = 'smem constant byte address 0x4 - core index']
  #allocation1 [shape = 'u32[144,128]{1,0:T(1,128)}', space=vmem, size = 0x12000, scoped, tag = 'internal scratch']
  %s0 = inlined_call_operand.vmem [shape: f32[8,8], index: 0, kind: input, shape index: {}]
  %s1 = inlined_call_operand.vmem [shape: f32[8,128], index: 1, kind: input, shape index: {}]
  %s2 = inlined_call_operand.vmem [shape: f32[1,128], index: 2, kind: input, shape index: {}]
  %s3 = inlined_call_operand.vmem [shape: f32[128,2], index: 3, kind: input, shape index: {}]
  %s4 = inlined_call_operand.vmem [shape: f32[1,2], index: 4, kind: input, shape index: {}]
  %s5 = inlined_call_operand.vmem [shape: f32[8,2], index: 5, kind: output, shape index: {}]
  %s6 = sld [smem:[#allocation0]]
  $region30: #{tpu_custom_call.1} parent=0
    _
  %s8 = ssub.s32 1, %s6
  %s9 = scalar_select 0, %s8, %s6
  // Predicated region
  $region2: #{tpu_custom_call.1} parent=0 // pred_check
    _
  $region3: #{tpu_custom_call.1} parent=0 // pred_check_branch
    %11 = sbr.rel (0) target = $region5
  $region4: #{tpu_custom_call.1} parent=0 // pred_region
    _
  $region5: #{tpu_custom_call.1} parent=0 // pred_fallthru
    _
  // Predicated region
  $region6: #{tpu_custom_call.1} parent=0 // pred_check
    _
  $region7: #{tpu_custom_call.1} parent=0 // pred_check_branch
    %13 = sbr.rel (0) target = $region9
  $region8: #{tpu_custom_call.1} parent=0 // pred_region
    _
  $region9: #{tpu_custom_call.1} parent=0 // pred_fallthru
    _
  // Predicated region
  $region10: #{tpu_custom_call.1} parent=0 // pred_check
    _
  $region11: #{tpu_custom_call.1} parent=0 // pred_check_branch
    %15 = sbr.rel (0) target = $region13
  $region12: #{tpu_custom_call.1} parent=0 // pred_region
    _
  $region13: #{tpu_custom_call.1} parent=0 // pred_fallthru
    _
  // Predicated region
  $region14: #{tpu_custom_call.1} parent=0 // pred_check
    _
  $region15: #{tpu_custom_call.1} parent=0 // pred_check_branch
    %17 = sbr.rel (0) target = $region17
  $region16: #{tpu_custom_call.1} parent=0 // pred_region
    _
  $region17: #{tpu_custom_call.1} parent=0 // pred_fallthru
    _
  // Predicated region
  $region18: #{tpu_custom_call.1} parent=0 // pred_check
    _
  $region19: #{tpu_custom_call.1} parent=0 // pred_check_branch
    %19 = sbr.rel (0) target = $region21
  $region20: #{tpu_custom_call.1} parent=0 // pred_region
    _
  $region21: #{tpu_custom_call.1} parent=0 // pred_fallthru
    _
  %v20 = vld [vmem:[%s0] sm:$0xff]
  %v21 = vld [vmem:[%s1] sm:$0xff]
  %v22 = vld [vmem:[%s2] sm:$0x1]
  %v24 = vlaneseq
  %v25 = vshrl.u32 %v24, 7
  %v26 = vsub.s32 0, %v25
  %v27 = vrot.slane %v22, %v26
  %vm29 = vcmask 64512
  %v31 = vsel %vm29, %v20, 0
  %33 = vmatprep.subr.mxu0 0.0
  %34 = vmatpush1.msra.mxu0 0.0
  %35 = vmatprep.subr.mxu0 0.0
  %36 = vmatpush1.msra.mxu0 0.0
  %37 = vmatprep.subr.mxu0 0.0
  %38 = vmatpush1.msra.mxu0 0.0
  %39 = vmatprep.subr.mxu0 0.0
  %40 = vmatpush1.msra.mxu0 0.0
  %41 = vmatprep.subr.mxu0 0.0
  %42 = vmatpush1.msra.mxu0 0.0
  %43 = vmatprep.subr.mxu0 0.0
  %44 = vmatpush1.msra.mxu0 0.0
  %45 = vmatprep.subr.mxu0 0.0
  %46 = vmatpush1.msra.mxu0 0.0
  %47 = vmatprep.subr.mxu0 0.0
  %48 = vmatpush1.msra.mxu0 0.0
  %49 = vmatprep.subr.mxu0 0.0
  %50 = vmatpush1.msra.mxu0 0.0
  %51 = vmatprep.subr.mxu0 0.0
  %52 = vmatpush1.msra.mxu0 0.0
  %53 = vmatprep.subr.mxu0 0.0
  %54 = vmatpush1.msra.mxu0 0.0
  %55 = vmatprep.subr.mxu0 0.0
  %56 = vmatpush1.msra.mxu0 0.0
  %57 = vmatprep.subr.mxu0 0.0
  %58 = vmatpush1.msra.mxu0 0.0
  %59 = vmatprep.subr.mxu0 0.0
  %60 = vmatpush1.msra.mxu0 0.0
  %61 = vmatprep.subr.mxu0 0.0
  %62 = vmatpush1.msra.mxu0 0.0
  %63 = vmatprep.subr.mxu0 0.0
  %64 = vmatpush1.msra.mxu0 %v21
  %65 = vmatprep.subr.mxu0 0.0
  %66 = vmatpush2.msra.mxu0 0.0
  %67 = vmatprep.subr.mxu0 0.0
  %68 = vmatpush2.msra.mxu0 0.0
  %69 = vmatprep.subr.mxu0 0.0
  %70 = vmatpush2.msra.mxu0 0.0
  %71 = vmatprep.subr.mxu0 0.0
  %72 = vmatpush2.msra.mxu0 0.0
  %73 = vmatprep.subr.mxu0 0.0
  %74 = vmatpush2.msra.mxu0 0.0
  %75 = vmatprep.subr.mxu0 0.0
  %76 = vmatpush2.msra.mxu0 0.0
  %77 = vmatprep.subr.mxu0 0.0
  %78 = vmatpush2.msra.mxu0 0.0
  %79 = vmatprep.subr.mxu0 0.0
  %80 = vmatpush2.msra.mxu0 0.0
  %81 = vmatprep.subr.mxu0 0.0
  %82 = vmatpush2.msra.mxu0 0.0
  %83 = vmatprep.subr.mxu0 0.0
  %84 = vmatpush2.msra.mxu0 0.0
  %85 = vmatprep.subr.mxu0 0.0
  %86 = vmatpush2.msra.mxu0 0.0
  %87 = vmatprep.subr.mxu0 0.0
  %88 = vmatpush2.msra.mxu0 0.0
  %89 = vmatprep.subr.mxu0 0.0
  %90 = vmatpush2.msra.mxu0 0.0
  %91 = vmatprep.subr.mxu0 0.0
  %92 = vmatpush2.msra.mxu0 0.0
  %93 = vmatprep.subr.mxu0 0.0
  %94 = vmatpush2.msra.mxu0 0.0
  %95 = vmatprep.subr.mxu0 0.0
  %96 = vmatpush2.msra.mxu0 0.0
  %97 = vmatprep.mubr.f32.mxu0 0.0
  %98 = vmatmul.mubr.f32.gmra.mxu0 %v31
  %v99 = vpop.f32.mrf.mxu0
  %v100 = vadd.f32 %v27, %v99
  %v101 = vpop.f32.mrf.mxu0
  %102 = vdwg.mxu0
  %v103 = vmax.f32 %v100, 0.0
  %v104 = vld [vmem:[%s3] sm:$0xff]
  %v105 = vld [vmem:[%s3 + $0x8] sm:$0xff]
  %v106 = vld [vmem:[%s3 + $0x10] sm:$0xff]
  %v107 = vld [vmem:[%s3 + $0x18] sm:$0xff]
  %v108 = vld [vmem:[%s3 + $0x20] sm:$0xff]
  %v109 = vld [vmem:[%s3 + $0x28] sm:$0xff]
  %v110 = vld [vmem:[%s3 + $0x30] sm:$0xff]
  %v111 = vld [vmem:[%s3 + $0x38] sm:$0xff]
  %v112 = vld [vmem:[%s3 + $0x40] sm:$0xff]
  %v113 = vld [vmem:[%s3 + $0x48] sm:$0xff]
  %v114 = vld [vmem:[%s3 + $0x50] sm:$0xff]
  %v115 = vld [vmem:[%s3 + $0x58] sm:$0xff]
  %v116 = vld [vmem:[%s3 + $0x60] sm:$0xff]
  %v117 = vld [vmem:[%s3 + $0x68] sm:$0xff]
  %v118 = vld [vmem:[%s3 + $0x70] sm:$0xff]
  %v119 = vld [vmem:[%s3 + $0x78] sm:$0xff]
  %v120 = vld [vmem:[%s4] sm:$0x1]
  %v122 = vlaneseq
  %v123 = vshrl.u32 %v122, 7
  %v124 = vsub.s32 0, %v123
  %v125 = vrot.slane %v120, %v124
  %127 = vmatprep.subr.mxu0 0.0
  %128 = vmatpush1.msra.mxu0 %v119
  %129 = vmatprep.subr.mxu0 0.0
  %130 = vmatpush1.msra.mxu0 %v118
  %131 = vmatprep.subr.mxu0 0.0
  %132 = vmatpush1.msra.mxu0 %v117
  %133 = vmatprep.subr.mxu0 0.0
  %134 = vmatpush1.msra.mxu0 %v116
  %135 = vmatprep.subr.mxu0 0.0
  %136 = vmatpush1.msra.mxu0 %v115
  %137 = vmatprep.subr.mxu0 0.0
  %138 = vmatpush1.msra.mxu0 %v114
  %139 = vmatprep.subr.mxu0 0.0
  %140 = vmatpush1.msra.mxu0 %v113
  %141 = vmatprep.subr.mxu0 0.0
  %142 = vmatpush1.msra.mxu0 %v112
  %143 = vmatprep.subr.mxu0 0.0
  %144 = vmatpush1.msra.mxu0 %v111
  %145 = vmatprep.subr.mxu0 0.0
  %146 = vmatpush1.msra.mxu0 %v110
  %147 = vmatprep.subr.mxu0 0.0
  %148 = vmatpush1.msra.mxu0 %v109
  %149 = vmatprep.subr.mxu0 0.0
  %150 = vmatpush1.msra.mxu0 %v108
  %151 = vmatprep.subr.mxu0 0.0
  %152 = vmatpush1.msra.mxu0 %v107
  %153 = vmatprep.subr.mxu0 0.0
  %154 = vmatpush1.msra.mxu0 %v106
  %155 = vmatprep.subr.mxu0 0.0
  %156 = vmatpush1.msra.mxu0 %v105
  %157 = vmatprep.subr.mxu0 0.0
  %158 = vmatpush1.msra.mxu0 %v104
  %159 = vmatprep.subr.mxu0 0.0
  %160 = vmatpush2.msra.mxu0 0.0
  %161 = vmatprep.subr.mxu0 0.0
  %162 = vmatpush2.msra.mxu0 0.0
  %163 = vmatprep.subr.mxu0 0.0
  %164 = vmatpush2.msra.mxu0 0.0
  %165 = vmatprep.subr.mxu0 0.0
  %166 = vmatpush2.msra.mxu0 0.0
  %167 = vmatprep.subr.mxu0 0.0
  %168 = vmatpush2.msra.mxu0 0.0
  %169 = vmatprep.subr.mxu0 0.0
  %170 = vmatpush2.msra.mxu0 0.0
  %171 = vmatprep.subr.mxu0 0.0
  %172 = vmatpush2.msra.mxu0 0.0
  %173 = vmatprep.subr.mxu0 0.0
  %174 = vmatpush2.msra.mxu0 0.0
  %175 = vmatprep.subr.mxu0 0.0
  %176 = vmatpush2.msra.mxu0 0.0
  %177 = vmatprep.subr.mxu0 0.0
  %178 = vmatpush2.msra.mxu0 0.0
  %179 = vmatprep.subr.mxu0 0.0
  %180 = vmatpush2.msra.mxu0 0.0
  %181 = vmatprep.subr.mxu0 0.0
  %182 = vmatpush2.msra.mxu0 0.0
  %183 = vmatprep.subr.mxu0 0.0
  %184 = vmatpush2.msra.mxu0 0.0
  %185 = vmatprep.subr.mxu0 0.0
  %186 = vmatpush2.msra.mxu0 0.0
  %187 = vmatprep.subr.mxu0 0.0
  %188 = vmatpush2.msra.mxu0 0.0
  %189 = vmatprep.subr.mxu0 0.0
  %190 = vmatpush2.msra.mxu0 0.0
  %191 = vmatprep.mubr.f32.mxu0 0.0
  %192 = vmatmul.mubr.f32.gmra.mxu0 %v103
  %v193 = vpop.f32.mrf.mxu0
  %v194 = vadd.f32 %v125, %v193
  %v195 = vpop.f32.mrf.mxu0
  %196 = vdwg.mxu0
  %vm197 = vcmask 15360
  %198 = vst.msk [vmem:[%s5] sm:$0xff] %vm197, %v194
  // Predicated region
  $region22: #{tpu_custom_call.1} parent=0 // pred_check
    _
  $region23: #{tpu_custom_call.1} parent=0 // pred_check_branch
    %200 = sbr.rel (0) target = $region25
  $region24: #{tpu_custom_call.1} parent=0 // pred_region
    _
  $region25: #{tpu_custom_call.1} parent=0 // pred_fallthru
    _
  // Predicated region
  $region26: #{tpu_custom_call.1} parent=0 // pred_check
    _
  $region27: #{tpu_custom_call.1} parent=0 // pred_check_branch
    %202 = sbr.rel (0) target = $region29
  $region28: #{tpu_custom_call.1} parent=0 // pred_region
    _
  $region29: #{tpu_custom_call.1} parent=0 // pred_fallthru
    _

</llo_original>
